<compile_context>
chip_gen: v5e
topology: v5e:2x2
jax: 0.10.0
libtpu: 0.0.40
codegen_flags: <defaults>
</compile_context>

<pallas_src>
import functools

import jax
import jax.numpy as jnp
from jax.experimental import pallas as pl
from jax.experimental.pallas import tpu as pltpu

ACT_DTYPE = jnp.bfloat16            # matmul-operand / activation dtype (f32 accumulate)
_TM = 256                           # M tile (multiple of 8)
_TN = 512                           # N tile (multiple of 128) for linear()
_TK = 512                           # K tile (multiple of 128) for the fused FFN2+LN
_VMEM_LIMIT = 32 * 1024 * 1024      # explicit scoped-VMEM limit (safe on v5e/v6e/v7x)


def _m_tile(M):
    return M if M <= _TM else _TM


def _div_tile(dim, max_tile, align):
    """Largest tile <= max_tile that is a multiple of `align` and divides dim;
    full dim if dim <= max_tile or no such divisor exists."""
    if dim <= max_tile:
        return dim
    t = (max_tile // align) * align
    while t >= align:
        if dim % t == 0:
            return t
        t -= align
    return dim


# ----------------------------------------------------------------------------
# Pallas kernels: linear / layernorm family
# ----------------------------------------------------------------------------
def _linear_kernel(x_ref, w_ref, b_ref, o_ref, *, activation):
    y = jnp.dot(x_ref[...], w_ref[...], preferred_element_type=jnp.float32)
    y = y + b_ref[...].astype(jnp.float32)
    if activation == "gelu":
        # TODO(synk): HF BERT/ViT default to exact erf GELU; tanh approx drifts slightly.
        y = jax.nn.gelu(y, approximate=True)
    o_ref[...] = y.astype(o_ref.dtype)


def linear(x, w, b, activation="none"):
    """act(x @ w + b).  x:(M,K) bf16, w:(K,N) bf16, b:(N,) f32 -> (M,N) bf16.

    Grid over (M tiles, N tiles), both 'parallel'; weight block resident per N tile.
    """
    M, K = x.shape
    K2, N = w.shape
    assert K == K2
    tm = _m_tile(M)
    tn = _div_tile(N, _TN, 128)
    kern = functools.partial(_linear_kernel, activation=activation)
    return pl.pallas_call(
        kern,
        out_shape=jax.ShapeDtypeStruct((M, N), ACT_DTYPE),
        grid=(pl.cdiv(M, tm), N // tn),
        in_specs=[
            pl.BlockSpec((tm, K), lambda i, j: (i, 0)),
            pl.BlockSpec((K, tn), lambda i, j: (0, j)),
            pl.BlockSpec((1, tn), lambda i, j: (0, j)),
        ],
        out_specs=pl.BlockSpec((tm, tn), lambda i, j: (i, j)),
        compiler_params=pltpu.CompilerParams(
            dimension_semantics=("parallel", "parallel"),
            vmem_limit_bytes=_VMEM_LIMIT),
    )(x, w, b.reshape(1, N))


def _linear_res_ln_kernel(x_ref, w_ref, b_ref, r_ref, g_ref, bt_ref, o_ref,
                          acc_ref, *, eps):
    # fused: y = LayerNorm(x @ w + b + residual), accumulated over K tiles in f32
    k = pl.program_id(1)

    @pl.when(k == 0)
    def _():
        acc_ref[...] = jnp.zeros_like(acc_ref)

    acc_ref[...] += jnp.dot(x_ref[...], w_ref[...],
                            preferred_element_type=jnp.float32)

    @pl.when(k == pl.num_programs(1) - 1)
    def _():
        y = acc_ref[...] + b_ref[...].astype(jnp.float32) + r_ref[...].astype(jnp.float32)
        mu = jnp.mean(y, axis=-1, keepdims=True)
        var = jnp.mean((y - mu) ** 2, axis=-1, keepdims=True)
        y = (y - mu) * jax.lax.rsqrt(var + eps)
        y = y * g_ref[...].astype(jnp.float32) + bt_ref[...].astype(jnp.float32)
        o_ref[...] = y.astype(o_ref.dtype)


def linear_residual_layernorm(x, w, b, residual, gamma, beta, eps=1e-12):
    """LayerNorm(x @ w + b + residual) over the last axis.

    Grid: (M tiles 'parallel', K tiles 'arbitrary' reduction with f32 acc scratch).
    """
    M, K = x.shape
    _, N = w.shape
    tm = _m_tile(M)
    tk = _div_tile(K, _TK, 128)
    kern = functools.partial(_linear_res_ln_kernel, eps=eps)
    return pl.pallas_call(
        kern,
        out_shape=jax.ShapeDtypeStruct((M, N), ACT_DTYPE),
        grid=(pl.cdiv(M, tm), K // tk),
        in_specs=[
            pl.BlockSpec((tm, tk), lambda i, k: (i, k)),
            pl.BlockSpec((tk, N), lambda i, k: (k, 0)),
            pl.BlockSpec((1, N), lambda i, k: (0, 0)),
            pl.BlockSpec((tm, N), lambda i, k: (i, 0)),
            pl.BlockSpec((1, N), lambda i, k: (0, 0)),
            pl.BlockSpec((1, N), lambda i, k: (0, 0)),
        ],
        out_specs=pl.BlockSpec((tm, N), lambda i, k: (i, 0)),
        scratch_shapes=[pltpu.VMEM((tm, N), jnp.float32)],
        compiler_params=pltpu.CompilerParams(
            dimension_semantics=("parallel", "arbitrary"),
            vmem_limit_bytes=_VMEM_LIMIT),
    )(x, w, b.reshape(1, N), residual, gamma.reshape(1, N), beta.reshape(1, N))


def _ln_kernel(x_ref, g_ref, b_ref, o_ref, *, eps):
    x = x_ref[...].astype(jnp.float32)
    mu = jnp.mean(x, axis=-1, keepdims=True)
    var = jnp.mean((x - mu) ** 2, axis=-1, keepdims=True)
    y = (x - mu) * jax.lax.rsqrt(var + eps)
    y = y * g_ref[...].astype(jnp.float32) + b_ref[...].astype(jnp.float32)
    o_ref[...] = y.astype(o_ref.dtype)


def layernorm(x, gamma, beta, eps=1e-12):
    """Standalone LayerNorm (BERT embedding LN only)."""
    M, E = x.shape
    tm = _m_tile(M)
    kern = functools.partial(_ln_kernel, eps=eps)
    return pl.pallas_call(
        kern,
        out_shape=jax.ShapeDtypeStruct((M, E), ACT_DTYPE),
        grid=(pl.cdiv(M, tm),),
        in_specs=[
            pl.BlockSpec((tm, E), lambda i: (i, 0)),
            pl.BlockSpec((1, E), lambda i: (0, 0)),
            pl.BlockSpec((1, E), lambda i: (0, 0)),
        ],
        out_specs=pl.BlockSpec((tm, E), lambda i: (i, 0)),
        compiler_params=pltpu.CompilerParams(
            dimension_semantics=("parallel",),
            vmem_limit_bytes=_VMEM_LIMIT),
    )(x, gamma.reshape(1, E), beta.reshape(1, E))


# ----------------------------------------------------------------------------
# Pallas kernels: fused MHA + output-projection + residual + LayerNorm
# ----------------------------------------------------------------------------
def _attn_oproj_ln(q, kv, mask, wo_ref, bo_ref, r, g_ref, b_ref, o_ref, acc_ref,
                   num_heads, eps):
    """Shared body.  q:(Lq,E) kv:(Lk,2E) [K|V] mask:(1,Lk) f32 r:(Lq,E).

    Q is already pre-scaled via the folded 1/sqrt(Dh) in wq/bq.
    Per-head results land in the f32 VMEM accumulator acc_ref (no lane concat).
    """
    E = q.shape[-1]
    Dh = E // num_heads
    for h in range(num_heads):                       # static unrolled loop over heads
        qh = q[:, h * Dh:(h + 1) * Dh]               # (Lq, Dh)
        kh = kv[:, h * Dh:(h + 1) * Dh]              # (Lk, Dh)
        vh = kv[:, E + h * Dh:E + (h + 1) * Dh]      # (Lk, Dh)
        # contract last axes directly -> no k.T materialization
        s = jax.lax.dot_general(qh, kh, (((1,), (1,)), ((), ())),
                                preferred_element_type=jnp.float32)   # (Lq, Lk) f32
        s = s + mask
        s = s - jnp.max(s, axis=-1, keepdims=True)
        p = jnp.exp(s)
        p = p * pl.reciprocal(jnp.sum(p, axis=-1, keepdims=True), approx=True)
        acc_ref[:, h * Dh:(h + 1) * Dh] = jnp.dot(
            p.astype(vh.dtype), vh, preferred_element_type=jnp.float32)   # (Lq, Dh)
    # epilogue: output projection + residual add + LayerNorm (never leaves VMEM)
    a = acc_ref[...].astype(wo_ref.dtype)                                 # (Lq, E)
    y = jnp.dot(a, wo_ref[...], preferred_element_type=jnp.float32)
    y = y + bo_ref[...].astype(jnp.float32) + r.astype(jnp.float32)
    mu = jnp.mean(y, axis=-1, keepdims=True)
    var = jnp.mean((y - mu) ** 2, axis=-1, keepdims=True)
    y = (y - mu) * jax.lax.rsqrt(var + eps)
    y = y * g_ref[...].astype(jnp.float32) + b_ref[...].astype(jnp.float32)
    o_ref[0] = y.astype(o_ref.dtype)


def _self_attn_block_kernel(qkv_ref, m_ref, wo_ref, bo_ref, r_ref, g_ref, b_ref,
                            o_ref, acc_ref, *, num_heads, eps):
    """Self-attention: fused QKV tensor (1, L, 3E) — Q|K|V along the lane dim."""
    E = qkv_ref.shape[-1] // 3
    qkv = qkv_ref[0]
    _attn_oproj_ln(qkv[:, :E], qkv[:, E:], m_ref[0].astype(jnp.float32),
                   wo_ref, bo_ref, r_ref[0], g_ref, b_ref, o_ref, acc_ref,
                   num_heads, eps)


def _cross_attn_block_kernel(q_ref, kv_ref, m_ref, wo_ref, bo_ref, r_ref, g_ref,
                             b_ref, o_ref, acc_ref, *, num_heads, eps):
    """Cross-attention: separate q (1, Lq, E) and kv (1, Lk, 2E)."""
    _attn_oproj_ln(q_ref[0], kv_ref[0], m_ref[0].astype(jnp.float32),
                   wo_ref, bo_ref, r_ref[0], g_ref, b_ref, o_ref, acc_ref,
                   num_heads, eps)


def self_attention_block(x, mask_add, attn_p, ln_g, ln_b, num_heads, eps=1e-12):
    """LN(x + Wo * MHA(x, x) + bo) with a single fused QKV projection."""
    B, L, E = x.shape
    qkv = linear(x.reshape(B * L, E), attn_p["wqkv"], attn_p["bqkv"]
                 ).reshape(B, L, 3 * E)
    if mask_add is None:
        mask_add = jnp.zeros((B, 1, L), jnp.float32)
    kern = functools.partial(_self_attn_block_kernel, num_heads=num_heads, eps=eps)
    return pl.pallas_call(
        kern,
        out_shape=jax.ShapeDtypeStruct((B, L, E), ACT_DTYPE),
        grid=(B,),
        in_specs=[
            pl.BlockSpec((1, L, 3 * E), lambda b: (b, 0, 0)),
            pl.BlockSpec((1, 1, L), lambda b: (b, 0, 0)),
            pl.BlockSpec((E, E), lambda b: (0, 0)),      # wo resident across batch
            pl.BlockSpec((1, E), lambda b: (0, 0)),
            pl.BlockSpec((1, L, E), lambda b: (b, 0, 0)),  # residual = x
            pl.BlockSpec((1, E), lambda b: (0, 0)),
            pl.BlockSpec((1, E), lambda b: (0, 0)),
        ],
        out_specs=pl.BlockSpec((1, L, E), lambda b: (b, 0, 0)),
        scratch_shapes=[pltpu.VMEM((L, E), jnp.float32)],
        compiler_params=pltpu.CompilerParams(
            dimension_semantics=("parallel",),
            vmem_limit_bytes=_VMEM_LIMIT),
    )(qkv, mask_add, attn_p["wo"], attn_p["bo"].reshape(1, E), x,
      ln_g.reshape(1, E), ln_b.reshape(1, E))


def cross_attention_block(x_q, x_kv, mask_add, attn_p, ln_g, ln_b, num_heads,
                          eps=1e-12):
    """LN(x_q + Wo * MHA(x_q, x_kv) + bo) with split Q / fused-KV projections."""
    B, Lq, E = x_q.shape
    _, Lk, _ = x_kv.shape
    q = linear(x_q.reshape(B * Lq, E), attn_p["wq"], attn_p["bq"]).reshape(B, Lq, E)
    kv = linear(x_kv.reshape(B * Lk, E), attn_p["wkv"], attn_p["bkv"]
                ).reshape(B, Lk, 2 * E)
    if mask_add is None:
        mask_add = jnp.zeros((B, 1, Lk), jnp.float32)
    kern = functools.partial(_cross_attn_block_kernel, num_heads=num_heads, eps=eps)
    return pl.pallas_call(
        kern,
        out_shape=jax.ShapeDtypeStruct((B, Lq, E), ACT_DTYPE),
        grid=(B,),
        in_specs=[
            pl.BlockSpec((1, Lq, E), lambda b: (b, 0, 0)),
            pl.BlockSpec((1, Lk, 2 * E), lambda b: (b, 0, 0)),
            pl.BlockSpec((1, 1, Lk), lambda b: (b, 0, 0)),
            pl.BlockSpec((E, E), lambda b: (0, 0)),
            pl.BlockSpec((1, E), lambda b: (0, 0)),
            pl.BlockSpec((1, Lq, E), lambda b: (b, 0, 0)),
            pl.BlockSpec((1, E), lambda b: (0, 0)),
            pl.BlockSpec((1, E), lambda b: (0, 0)),
        ],
        out_specs=pl.BlockSpec((1, Lq, E), lambda b: (b, 0, 0)),
        scratch_shapes=[pltpu.VMEM((Lq, E), jnp.float32)],
        compiler_params=pltpu.CompilerParams(
            dimension_semantics=("parallel",),
            vmem_limit_bytes=_VMEM_LIMIT),
    )(q, kv, mask_add, attn_p["wo"], attn_p["bo"].reshape(1, E), x_q,
      ln_g.reshape(1, E), ln_b.reshape(1, E))


# ----------------------------------------------------------------------------
# Transformer building blocks (glue around the Pallas kernels)
# ----------------------------------------------------------------------------
def transformer_block(x_q, x_kv, mask_add, p, num_heads):
    """Post-LN block: [attn + o-proj + add + LN] -> FFN(GELU) -> [proj + add + LN].

    Self-attention blocks (params carry 'wqkv') use the fused QKV path; the two
    co-attention blocks use the cross path.
    """
    B, Lq, E = x_q.shape
    if "wqkv" in p["attn"]:
        x = self_attention_block(x_q, mask_add, p["attn"], p["ln1_g"], p["ln1_b"],
                                 num_heads)
    else:
        x = cross_attention_block(x_q, x_kv, mask_add, p["attn"], p["ln1_g"],
                                  p["ln1_b"], num_heads)
    # TODO(synk): residual stream round-trips through bf16 between kernels; the
    # PyTorch reference keeps f32 end-to-end (small accumulated drift).
    x2 = x.reshape(B * Lq, E)
    h = linear(x2, p["ffn_w1"], p["ffn_b1"], activation="gelu")
    y = linear_residual_layernorm(h, p["ffn_w2"], p["ffn_b2"],
                                  x2, p["ln2_g"], p["ln2_b"])
    return y.reshape(B, Lq, E)


# ----------------------------------------------------------------------------
# Sub-models
# ----------------------------------------------------------------------------
def vit_forward(image, p, num_heads):
    """ViT: NCHW image -> (B, 1 + num_patches, E) token sequence."""
    B, C, H, W = image.shape
    ps = p["patch_size"]
    gh, gw = H // ps, W // ps
    patches = image.reshape(B, C, gh, ps, gw, ps)
    patches = patches.transpose(0, 2, 4, 1, 3, 5).reshape(B, gh * gw, C * ps * ps)
    patches = patches.astype(ACT_DTYPE)
    Np = gh * gw
    x = linear(patches.reshape(B * Np, C * ps * ps), p["patch_w"], p["patch_b"])
    E = x.shape[-1]
    x = x.reshape(B, Np, E)
    cls = jnp.broadcast_to(p["cls"].astype(ACT_DTYPE), (B, 1, E))
    x = jnp.concatenate([cls, x], axis=1)
    x = x + p["pos"][None, : x.shape[1], :].astype(ACT_DTYPE)
    for blk in p["blocks"]:
        x = transformer_block(x, x, None, blk, num_heads)
    return x  # (B, Limg, E)


def bert_forward(input_ids, attention_mask, token_type_ids, p, num_heads):
    """Tiny BERT: embeddings + LN + self-attention encoder -> last_hidden_state."""
    B, L = input_ids.shape
    emb = (p["word_emb"][input_ids]
           + p["pos_emb"][None, :L, :]
           + p["type_emb"][token_type_ids]).astype(ACT_DTYPE)
    E = emb.shape[-1]
    x = layernorm(emb.reshape(B * L, E), p["emb_ln_g"], p["emb_ln_b"]).reshape(B, L, E)
    mask_add = (1.0 - attention_mask.astype(jnp.float32))[:, None, :] * -10000.0
    for blk in p["blocks"]:
        x = transformer_block(x, x, mask_add, blk, num_heads)
    return x  # (B, Ltxt, E)


def coattention_forward(img, txt, txt_mask_add, p, num_heads):
    """ViLBERT-style co-attention + per-stream output transformer, repeated."""
    for layer in p["layers"]:
        # co-attention: each stream queries the other (cross path, split Q/KV)
        img_new = transformer_block(img, txt, txt_mask_add, layer["co_img"], num_heads)
        txt_new = transformer_block(txt, img, None, layer["co_txt"], num_heads)
        # output transformers: per-stream self-attention (fused QKV path)
        img = transformer_block(img_new, img_new, None, layer["out_img"], num_heads)
        txt = transformer_block(txt_new, txt_new, txt_mask_add, layer["out_txt"], num_heads)
    return img, txt


def tilbert_forward(image, text_input_ids, text_attention_mask, text_token_type_ids,
                    params, classifier_type="token", merge_mode="mul"):
    num_heads = params["num_heads"]
    img = vit_forward(image, params["vit"], num_heads)                       # (B, Limg, E)
    txt = bert_forward(text_input_ids, text_attention_mask,
                       text_token_type_ids, params["bert"], num_heads)       # (B, Ltxt, E)
    # PyTorch rearranges text to (L, B, E); we stay in (B, L, E) — equivalent semantics.
    txt_mask_add = (1.0 - text_attention_mask.astype(jnp.float32))[:, None, :] * -10000.0
    img, txt = coattention_forward(img, txt, txt_mask_add, params["coattn"], num_heads)

    if classifier_type == "token":
        img_c = img[:, 0, :].astype(jnp.float32)   # == image_embedding[0] in (L,B,E) layout
        txt_c = txt[:, 0, :].astype(jnp.float32)
    elif classifier_type == "gap":
        img_c = img.astype(jnp.float32).mean(axis=1)
        txt_c = txt.astype(jnp.float32).mean(axis=1)
    else:
        raise ValueError(classifier_type)

    if merge_mode == "mul":
        return img_c * txt_c            # (B, E) product: below per-call cost -> plain jnp
    elif merge_mode == "add":
        return img_c + txt_c
    elif merge_mode == "concat":
        # Matches torch.cat([image_embedding, text_embedding], axis=0) on (B, E)
        # tensors in the reference -> (2B, E).
        return jnp.concatenate([img_c, txt_c], axis=0)
    else:
        raise ValueError(merge_mode)


# ----------------------------------------------------------------------------
# Deterministic parameter init (synthetic — no checkpoint loading)
# ----------------------------------------------------------------------------
def init_dense(key, din, dout):
    w = (0.02 * jax.random.normal(key, (din, dout), jnp.float32)).astype(ACT_DTYPE)
    b = jnp.zeros((dout,), jnp.float32)
    return w, b


def init_attn_params(key, E, heads, cross):
    Dh = E // heads
    scale = 1.0 / (Dh ** 0.5)
    kq, kk, kv, ko = jax.random.split(key, 4)
    wq, bq = init_dense(kq, E, E)
    # fold the 1/sqrt(Dh) attention scale into the Q projection (free; avoids an
    # in-kernel (Lq,E) multiply and an extra bf16 rounding step)
    wq = (wq.astype(jnp.float32) * scale).astype(ACT_DTYPE)
    bq = bq * scale
    wk, bk = init_dense(kk, E, E)
    wv, bv = init_dense(kv, E, E)
    wo, bo = init_dense(ko, E, E)
    if cross:
        # cross-attention: Q comes from the other stream -> keep Q separate, fuse K/V
        return {
            "wq": wq, "bq": bq,
            "wkv": jnp.concatenate([wk, wv], axis=1),
            "bkv": jnp.concatenate([bk, bv]),
            "wo": wo, "bo": bo,
        }
    # self-attention: single fused (E, 3E) QKV projection
    return {
        "wqkv": jnp.concatenate([wq, wk, wv], axis=1),
        "bqkv": jnp.concatenate([bq, bk, bv]),
        "wo": wo, "bo": bo,
    }


def init_block(key, E, ffn, heads, cross=False):
    k1, k2, k3 = jax.random.split(key, 3)
    p = {"attn": init_attn_params(k1, E, heads, cross)}
    p["ffn_w1"], p["ffn_b1"] = init_dense(k2, E, ffn)
    p["ffn_w2"], p["ffn_b2"] = init_dense(k3, ffn, E)
    p["ln1_g"] = jnp.ones((E,), jnp.float32)
    p["ln1_b"] = jnp.zeros((E,), jnp.float32)
    p["ln2_g"] = jnp.ones((E,), jnp.float32)
    p["ln2_b"] = jnp.zeros((E,), jnp.float32)
    return p


def init_params(key, *, C, patch, img_hw, E, heads, ffn, vocab, max_len, type_vocab,
                n_vit_layers=1, n_bert_layers=1, n_co_layers=1):
    keys = jax.random.split(key, 9)
    Himg, Wimg = img_hw
    num_patches = (Himg // patch) * (Wimg // patch)

    vit = {"patch_size": patch}
    vit["patch_w"], vit["patch_b"] = init_dense(keys[0], C * patch * patch, E)
    vit["cls"] = 0.02 * jax.random.normal(keys[1], (1, E), jnp.float32)
    vit["pos"] = 0.02 * jax.random.normal(keys[2], (num_patches + 1, E), jnp.float32)
    vit["blocks"] = [init_block(k, E, ffn, heads)
                     for k in jax.random.split(keys[3], n_vit_layers)]

    bert = {}
    bert["word_emb"] = 0.02 * jax.random.normal(keys[4], (vocab, E), jnp.float32)
    bert["pos_emb"] = 0.02 * jax.random.normal(keys[5], (max_len, E), jnp.float32)
    bert["type_emb"] = 0.02 * jax.random.normal(keys[6], (type_vocab, E), jnp.float32)
    bert["emb_ln_g"] = jnp.ones((E,), jnp.float32)
    bert["emb_ln_b"] = jnp.zeros((E,), jnp.float32)
    bert["blocks"] = [init_block(k, E, ffn, heads)
                      for k in jax.random.split(keys[7], n_bert_layers)]

    co = {"layers": []}
    for k in jax.random.split(keys[8], n_co_layers):
        k1, k2, k3, k4 = jax.random.split(k, 4)
        co["layers"].append({
            "co_img": init_block(k1, E, ffn, heads, cross=True),
            "co_txt": init_block(k2, E, ffn, heads, cross=True),
            "out_img": init_block(k3, E, ffn, heads),
            "out_txt": init_block(k4, E, ffn, heads),
        })

    return {"vit": vit, "bert": bert, "coattn": co, "num_heads": heads}


# ----------------------------------------------------------------------------
# Demo
# ----------------------------------------------------------------------------
if __name__ == "__main__":
    # NOTE: demo shapes are intentionally tiny; the tiling constants only engage
    # at production (BERT-base-like) dims, where N/K tiling and the fusions matter.
    B, C, Himg, Wimg = 2, 3, 16, 16
    L, VOCAB, TYPE_VOCAB = 8, 100, 2
    E, HEADS, FFN, PATCH = 32, 4, 64, 8

    key = jax.random.PRNGKey(0)
    k_params, k_img, k_ids, k_types = jax.random.split(key, 4)

    params = init_params(
        k_params, C=C, patch=PATCH, img_hw=(Himg, Wimg), E=E, heads=HEADS, ffn=FFN,
        vocab=VOCAB, max_len=32, type_vocab=TYPE_VOCAB,
        n_vit_layers=1, n_bert_layers=1, n_co_layers=1,
    )

    image = jax.random.normal(k_img, (B, C, Himg, Wimg), jnp.float32)   # NCHW
    text_input_ids = jax.random.randint(k_ids, (B, L), 0, VOCAB, jnp.int32)
    text_attention_mask = jnp.ones((B, L), jnp.int32).at[1, -2:].set(0)  # pad last 2 of batch 1
    text_token_type_ids = jnp.zeros((B, L), jnp.int32)

    out = tilbert_forward(
        image, text_input_ids, text_attention_mask, text_token_type_ids,
        params, classifier_type="token", merge_mode="mul",
    )
    out = jax.block_until_ready(out)
    assert out.shape == (B, E), out.shape
    assert jnp.all(jnp.isfinite(out))
    # TODO(synk): real TilBert uses pretrained HF BertModel / full ViT weights; here
    # the architectures are reproduced with deterministic synthetic parameters.
    print("KERNEL_OK")
</pallas_src>

<mosaic_0001>
module attributes {stable_mosaic.version = 11 : i64} {
  func.func @_linear_kernel(%arg0: i32, %arg1: i32, %arg2: memref<8x192xbf16, #tpu.memory_space<vmem>>, %arg3: memref<192x32xbf16, #tpu.memory_space<vmem>>, %arg4: memref<1x32xf32, #tpu.memory_space<vmem>>, %arg5: memref<8x32xbf16, #tpu.memory_space<vmem>>) attributes {dimension_semantics = [#tpu.dimension_semantics<parallel>, #tpu.dimension_semantics<parallel>], iteration_bounds = array<i64: 1, 1>, scalar_prefetch = 0 : i64, scratch_operands = 0 : i64, tpu.core_type = #tpu.core_type<tc>, window_params = [{transform_indices = @transform_0, window_bounds = array<i64: 8, 192>}, {transform_indices = @transform_1, window_bounds = array<i64: 192, 32>}, {transform_indices = @transform_2, window_bounds = array<i64: 1, 32>}, {transform_indices = @transform_3, window_bounds = array<i64: 8, 32>}]} {
    %c0 = arith.constant 0 : index
    %c0_0 = arith.constant 0 : index
    %0 = vector.load %arg2[%c0, %c0_0] : memref<8x192xbf16, #tpu.memory_space<vmem>>, vector<8x192xbf16>
    %c0_1 = arith.constant 0 : index
    %c0_2 = arith.constant 0 : index
    %1 = vector.load %arg3[%c0_1, %c0_2] : memref<192x32xbf16, #tpu.memory_space<vmem>>, vector<192x32xbf16>
    %cst = arith.constant dense<0.000000e+00> : vector<8x32xf32>
    %2 = tpu.matmul %0, %1, %cst {dimension_numbers = #tpu.dot_dimension_numbers<[1], [0], [0], [1], [0, 0, 1, 1], [], []>} : vector<8x192xbf16>, vector<192x32xbf16>, vector<8x32xf32> -> vector<8x32xf32>
    %c0_3 = arith.constant 0 : index
    %c0_4 = arith.constant 0 : index
    %3 = vector.load %arg4[%c0_3, %c0_4] : memref<1x32xf32, #tpu.memory_space<vmem>>, vector<1x32xf32>
    %4 = vector.broadcast %3 : vector<1x32xf32> to vector<8x32xf32>
    %5 = arith.addf %2, %4 : vector<8x32xf32>
    %6 = arith.truncf %5 : vector<8x32xf32> to vector<8x32xbf16>
    %c0_5 = arith.constant 0 : index
    %c0_6 = arith.constant 0 : index
    %7 = vector.load %arg5[%c0_5, %c0_6] : memref<8x32xbf16, #tpu.memory_space<vmem>>, vector<8x32xbf16>
    tpu.vector_store %arg5[%c0_5, %c0_6], %6 {strides = array<i32>} : memref<8x32xbf16, #tpu.memory_space<vmem>>, vector<8x32xbf16>,
    return
  }
  func.func @transform_0(%arg0: i32, %arg1: i32) -> (i32, i32) {
    %c0_i32 = arith.constant 0 : i32
    %c0_i32_0 = arith.constant 0 : i32
    return %arg0, %c0_i32 : i32, i32
  }
  func.func @transform_1(%arg0: i32, %arg1: i32) -> (i32, i32) {
    %c0_i32 = arith.constant 0 : i32
    %c0_i32_0 = arith.constant 0 : i32
    return %c0_i32, %arg1 : i32, i32
  }
  func.func @transform_2(%arg0: i32, %arg1: i32) -> (i32, i32) {
    %c0_i32 = arith.constant 0 : i32
    %c0_i32_0 = arith.constant 0 : i32
    return %c0_i32, %arg1 : i32, i32
  }
  func.func @transform_3(%arg0: i32, %arg1: i32) -> (i32, i32) {
    %c0_i32 = arith.constant 0 : i32
    return %arg0, %arg1 : i32, i32
  }
}

</mosaic_0001>

<llo_original>
// kernel: tpu_custom_call.1
$region0: #{tpu_custom_call.1}
  #allocation0 [shape = 'u32[]', space=smem, size = 0x4, offset = 0x4, fixed_abs, tag = 'smem constant byte address 0x4 - core index']
  #allocation1 [shape = 'u32[72,128]{1,0:T(1,128)}', space=vmem, size = 0x9000, scoped, tag = 'internal scratch']
  %s0 = inlined_call_operand.vmem [shape: bf16[8,192], index: 0, kind: input, shape index: {}]
  %s1 = inlined_call_operand.vmem [shape: bf16[192,32], index: 1, kind: input, shape index: {}]
  %s2 = inlined_call_operand.vmem [shape: f32[1,32], index: 2, kind: input, shape index: {}]
  %s3 = inlined_call_operand.hbm [shape: bf16[8,32], index: 3, kind: output, shape index: {}]
  %s4 = sld [smem:[#allocation0]]
  $region22: #{tpu_custom_call.1} parent=0
    _
  %s6 = ssub.s32 1, %s4
  %s7 = scalar_select 0, %s6, %s4
  $region1: #{tpu_custom_call.1} parent=0
    #allocation2 [shape = 'u8[2048]{0}', space=vmem, size = 0x800, scoped, tag = 'output window, operand 0, single buffered']
    #allocation3 [shape = 's32[1]{0}', space=sflag, size = 0x4, scoped, tag = 'scoped memory for tpu_custom_call.1']
    %8 = vsyncpa [#allocation3], 0
    // Predicated region
    $region2: #{tpu_custom_call.1} parent=1 // pred_check
      _
    $region3: #{tpu_custom_call.1} parent=1 // pred_check_branch
      %10 = sbr.rel (0) target = $region5
    $region4: #{tpu_custom_call.1} parent=1 // pred_region
      _
    $region5: #{tpu_custom_call.1} parent=1 // pred_fallthru
      _
    // Predicated region
    $region6: #{tpu_custom_call.1} parent=1 // pred_check
      _
    $region7: #{tpu_custom_call.1} parent=1 // pred_check_branch
      %12 = sbr.rel (0) target = $region9
    $region8: #{tpu_custom_call.1} parent=1 // pred_region
      _
    $region9: #{tpu_custom_call.1} parent=1 // pred_fallthru
      _
    // Predicated region
    $region10: #{tpu_custom_call.1} parent=1 // pred_check
      _
    $region11: #{tpu_custom_call.1} parent=1 // pred_check_branch
      %14 = sbr.rel (0) target = $region13
    $region12: #{tpu_custom_call.1} parent=1 // pred_region
      _
    $region13: #{tpu_custom_call.1} parent=1 // pred_fallthru
      _
    %v16 = vld [vmem:[%s0] sm:$0xff]
    %v17 = vld [vmem:[%s1] sm:$0xf]
    %v18 = vld [vmem:[%s1 + $0x4] sm:$0xf]
    %v19 = vld [vmem:[%s1 + $0x8] sm:$0xf]
    %v20 = vld [vmem:[%s1 + $0xc] sm:$0xf]
    %v21 = vld [vmem:[%s1 + $0x10] sm:$0xf]
    %v22 = vld [vmem:[%s1 + $0x14] sm:$0xf]
    %v23 = vld [vmem:[%s1 + $0x18] sm:$0xf]
    %v24 = vld [vmem:[%s1 + $0x1c] sm:$0xf]
    %v25 = vld [vmem:[%s1 + $0x20] sm:$0xf]
    %v26 = vld [vmem:[%s1 + $0x24] sm:$0xf]
    %v27 = vld [vmem:[%s1 + $0x28] sm:$0xf]
    %v28 = vld [vmem:[%s1 + $0x2c] sm:$0xf]
    %v29 = vld [vmem:[%s1 + $0x30] sm:$0xf]
    %v30 = vld [vmem:[%s1 + $0x34] sm:$0xf]
    %v31 = vld [vmem:[%s1 + $0x38] sm:$0xf]
    %v32 = vld [vmem:[%s1 + $0x3c] sm:$0xf]
    %v33 = vld [vmem:[%s1 + $0x40] sm:$0xf]
    %v34 = vld [vmem:[%s1 + $0x44] sm:$0xf]
    %v35 = vld [vmem:[%s1 + $0x48] sm:$0xf]
    %v36 = vld [vmem:[%s1 + $0x4c] sm:$0xf]
    %v37 = vld [vmem:[%s1 + $0x50] sm:$0xf]
    %v38 = vld [vmem:[%s1 + $0x54] sm:$0xf]
    %v39 = vld [vmem:[%s1 + $0x58] sm:$0xf]
    %v40 = vld [vmem:[%s1 + $0x5c] sm:$0xf]
    %v41 = vld [vmem:[%s2] sm:$0x1]
    %v43 = vperm.slane %v41, 0
    %v46 = vunpack.c.l.b16 %v16
    %v47 = vunpack.c.h.b16 %v16
    %v48 = vpack.c.b16 %v46, %v46
    %v49 = vpack.c.b16 %v47, %v47
    %v75 = vunpack.c.l.b16 %v17
    %v76 = vunpack.c.l.b16 %v18
    %v77 = vunpack.c.l.b16 %v19
    %v78 = vunpack.c.l.b16 %v20
    %v79 = vunpack.c.l.b16 %v21
    %v80 = vunpack.c.l.b16 %v22
    %v81 = vunpack.c.l.b16 %v23
    %v82 = vunpack.c.l.b16 %v24
    %v83 = vunpack.c.l.b16 %v25
    %v84 = vunpack.c.l.b16 %v26
    %v85 = vunpack.c.l.b16 %v27
    %v86 = vunpack.c.l.b16 %v28
    %v87 = vunpack.c.l.b16 %v29
    %v88 = vunpack.c.l.b16 %v30
    %v89 = vunpack.c.l.b16 %v31
    %v90 = vunpack.c.l.b16 %v32
    %v91 = vunpack.c.l.b16 %v33
    %v92 = vunpack.c.l.b16 %v34
    %v93 = vunpack.c.l.b16 %v35
    %v94 = vunpack.c.l.b16 %v36
    %v95 = vunpack.c.l.b16 %v37
    %v96 = vunpack.c.l.b16 %v38
    %v97 = vunpack.c.l.b16 %v39
    %v98 = vunpack.c.l.b16 %v40
    %v99 = vpack.c.b16 %v76, %v75
    %v100 = vpack.c.b16 %v78, %v77
    %v101 = vpack.c.b16 %v80, %v79
    %v102 = vpack.c.b16 %v82, %v81
    %v103 = vpack.c.b16 %v84, %v83
    %v104 = vpack.c.b16 %v86, %v85
    %v105 = vpack.c.b16 %v88, %v87
    %v106 = vpack.c.b16 %v90, %v89
    %v107 = vpack.c.b16 %v92, %v91
    %v108 = vpack.c.b16 %v94, %v93
    %v109 = vpack.c.b16 %v96, %v95
    %v110 = vpack.c.b16 %v98, %v97
    %vm123 = vcmask 523264
    %v125 = vsel %vm123, %v49, 0
    %127 = vmatpush.bf16.msra.mxu0 %v106
    %128 = vmatpush.bf16.msra.mxu0 %v105
    %129 = vmatpush.bf16.msra.mxu0 %v104
    %130 = vmatpush.bf16.msra.mxu0 %v103
    %131 = vmatpush.bf16.msra.mxu0 %v102
    %132 = vmatpush.bf16.msra.mxu0 %v101
    %133 = vmatpush.bf16.msra.mxu0 %v100
    %134 = vmatpush.bf16.msra.mxu0 %v99
    %135 = vmatmul.bf16.gmra.mxu0 %v48
    %v136 = vpop.f32.mrf.mxu0
    %v137 = vadd.f32 %v43, %v136
    %v138 = vpop.f32.mrf.mxu0
    %139 = vdwg.mxu0
    %140 = vmatpush.bf16.msra.mxu0 0
    %141 = vmatpush.bf16.msra.mxu0 0
    %142 = vmatpush.bf16.msra.mxu0 0
    %143 = vmatpush.bf16.msra.mxu0 0
    %144 = vmatpush.bf16.msra.mxu0 %v110
    %145 = vmatpush.bf16.msra.mxu0 %v109
    %146 = vmatpush.bf16.msra.mxu0 %v108
    %147 = vmatpush.bf16.msra.mxu0 %v107
    %148 = vmatmul.bf16.gmra.mxu0 %v125
    %v149 = vpop.f32.mrf.mxu0
    %v150 = vadd.f32 %v137, %v149
    %v151 = vpop.f32.mrf.mxu0
    %152 = vdwg.mxu0
    %v153 = vpack.c.bf16 %v150, %v150
    %vm154 = vcmask 257024
    %155 = vst.msk [vmem:[#allocation2] sm:$0xf] %vm154, %v153
    // Predicated region
    $region14: #{tpu_custom_call.1} parent=1 // pred_check
      _
    $region15: #{tpu_custom_call.1} parent=1 // pred_check_branch
      %157 = sbr.rel (0) target = $region17
    $region16: #{tpu_custom_call.1} parent=1 // pred_region
      %159 = vsyncadd [#allocation3], 0
      %s161 = sshll.u32 [#allocation2], 4
      %s162 = int_to_ptr.vmem [resolvable:$true] %s161
      %s163 = sshll.u32 %s3, 4
      %s164 = int_to_ptr.hbm [resolvable:$true] %s163
      %166 = dma.vmem_to_hbm [thread:$0]  %s162, 64, %s164, [#allocation3]
    $region17: #{tpu_custom_call.1} parent=1 // pred_fallthru
      _
    // Predicated region
    $region18: #{tpu_custom_call.1} parent=1 // pred_check
      _
    $region19: #{tpu_custom_call.1} parent=1 // pred_check_branch
      %168 = sbr.rel (0) target = $region21
    $region20: #{tpu_custom_call.1} parent=1 // pred_region
      %170 = dma.done [#allocation3], 64
    $region21: #{tpu_custom_call.1} parent=1 // pred_fallthru
      _
    %171 = vsyncpa [#allocation3], 1

</llo_original>
